<compile_context>
chip_gen: v7x
topology: tpu7x:2x2x1
jax: 0.10.0
libtpu: 0.0.40
codegen_flags: <defaults>
</compile_context>

<pallas_src>
import jax
import jax.numpy as jnp
from jax.experimental import pallas as pl
from jax.experimental.pallas import tpu as pltpu


def _round_up(x, m):
    return (x + m - 1) // m * m


def _make_kernel(hdp, dop):
    """hdp / dop: padded fused hidden / output feature widths (static)."""

    def kernel(feats_ref, w1_ref, vecs_ref, w2_ref, smask_ref, wp_ref,
               logits_ref, z_ref):
        # feats: (N, Din) f32.  w1: (Din, hdp).  vecs: (4, max(hdp,dop)) rows =
        # [b1, gamma, beta, b2].  w2: (hdp, dop) block-diag.  smask: (dop, dop)
        # block-diag ones.  wp: (dop, Pp) block-diag.
        x = feats_ref[...]                                   # already f32

        b1 = vecs_ref[0:1, 0:hdp]
        g1 = vecs_ref[1:2, 0:hdp]
        be1 = vecs_ref[2:3, 0:hdp]
        b2 = vecs_ref[3:4, 0:dop]

        # ---- Linear(input_dim -> H*hidden_dim), lane-dense over fused heads ----
        h = jnp.dot(x, w1_ref[...], preferred_element_type=jnp.float32) + b1

        # ---- BatchNorm1d (train mode: batch stats, biased var, eps=1e-5) ----
        # One-pass statistics: var = E[h^2] - mean^2 (halves the XLU reductions).
        mean = jnp.mean(h, axis=0, keepdims=True)
        var = jnp.maximum(
            jnp.mean(h * h, axis=0, keepdims=True) - mean * mean, 0.0)
        h = (h - mean) * jax.lax.rsqrt(var + 1e-5) * g1 + be1

        # ---- ReLU ----
        h = jnp.maximum(h, 0.0)

        # ---- Linear(hidden_dim -> output_dim), block-diagonal over heads ----
        z = jnp.dot(h, w2_ref[...], preferred_element_type=jnp.float32) + b2

        # ---- F.normalize(z, dim=1) per head (eps=1e-12) ----
        # Segmented per-head sum of squares via block-diag ones matmul, then a
        # single rsqrt (EUP) instead of sqrt + divide.
        ss = jnp.dot(z * z, smask_ref[...], preferred_element_type=jnp.float32)
        z = z * jax.lax.rsqrt(jnp.maximum(ss, 1e-24))

        # ---- Prototypes: bias-free linear with L2-normalized rows ----
        logits_ref[...] = jnp.dot(z, wp_ref[...],
                                  preferred_element_type=jnp.float32)
        z_ref[...] = z

    return kernel


@jax.jit
def multihead_forward(feats, params):
    """feats: (N, Din) f32.  params: dict of per-head stacked arrays."""
    f32 = jnp.float32
    N, Din = feats.shape
    H, _, Hd = params["w1"].shape
    Dout = params["w2"].shape[2]
    P = params["wp"].shape[2]

    HDp = _round_up(H * Hd, 128)     # fused hidden width, lane-padded
    DOp = _round_up(H * Dout, 128)   # fused output width, lane-padded
    Pp = _round_up(H * P, 128)       # fused prototype width, lane-padded
    VECp = max(HDp, DOp)

    # ---- head fusion + lane padding (wrapper-side layout plumbing) ----
    # First-layer weight: concat heads along output features.
    w1_cat = jnp.pad(
        jnp.transpose(params["w1"], (1, 0, 2)).reshape(Din, H * Hd),
        ((0, 0), (0, HDp - H * Hd)))

    # Coalesce the four small per-head vectors into a single (4, VECp) array.
    def _rowcat(a, width):
        v = a.reshape(1, -1).astype(f32)
        return jnp.pad(v, ((0, 0), (0, width - v.shape[1])))

    vecs = jnp.concatenate([
        _rowcat(params["b1"], VECp),    # linear bias
        _rowcat(params["g1"], VECp),    # BN gamma
        _rowcat(params["be1"], VECp),   # BN beta
        _rowcat(params["b2"], VECp),    # output-linear bias
    ], axis=0)

    # Second-layer / prototype weights: block-diagonal over heads, zero-padded.
    w2_blk = jnp.pad(
        jax.scipy.linalg.block_diag(*[params["w2"][h] for h in range(H)]),
        ((0, HDp - H * Hd), (0, DOp - H * Dout)))
    wp_blk = jnp.pad(
        jax.scipy.linalg.block_diag(*[params["wp"][h] for h in range(H)]),
        ((0, DOp - H * Dout), (0, Pp - H * P)))
    # Block-diag ones mask for per-head segmented sum-of-squares.
    smask = jnp.pad(
        jnp.kron(jnp.eye(H, dtype=f32), jnp.ones((Dout, Dout), f32)),
        ((0, DOp - H * Dout), (0, DOp - H * Dout)))

    vmem = pl.BlockSpec(memory_space=pltpu.MemorySpace.VMEM)
    logits_pad, z_pad = pl.pallas_call(
        _make_kernel(HDp, DOp),
        out_shape=(
            jax.ShapeDtypeStruct((N, Pp), f32),    # fused logits (lane-dense)
            jax.ShapeDtypeStruct((N, DOp), f32),   # fused z      (lane-dense)
        ),
        in_specs=[vmem] * 6,
        out_specs=(vmem, vmem),
    )(feats, w1_cat, vecs, w2_blk, smask, wp_blk)

    # Un-pad and restore the (H, N, .) layout outside the kernel.
    logits = logits_pad[:, :H * P].reshape(N, H, P).transpose(1, 0, 2)
    z = z_pad[:, :H * Dout].reshape(N, H, Dout).transpose(1, 0, 2)
    return [logits, z]


def init_params(key, num_heads, input_dim, hidden_dim, output_dim,
                num_prototypes):
    """Deterministic synthetic parameters (PyTorch-shaped, then transposed)."""
    ks = jax.random.split(key, 6)
    # PyTorch Linear weights are (out, in); store transposed (in, out) for x@W.
    w1 = 0.1 * jax.random.normal(ks[0], (num_heads, input_dim, hidden_dim),
                                 jnp.float32)
    b1 = 0.1 * jax.random.normal(ks[1], (num_heads, 1, hidden_dim), jnp.float32)
    g1 = jnp.ones((num_heads, 1, hidden_dim), jnp.float32)     # BN gamma init
    be1 = jnp.zeros((num_heads, 1, hidden_dim), jnp.float32)   # BN beta init
    w2 = 0.1 * jax.random.normal(ks[2], (num_heads, hidden_dim, output_dim),
                                 jnp.float32)
    b2 = 0.1 * jax.random.normal(ks[3], (num_heads, 1, output_dim), jnp.float32)
    # Prototypes: (P, Dout), L2-normalize each row (normalize_prototypes),
    # then transpose to (Dout, P) for the matmul.
    wp_rows = jax.random.normal(ks[4], (num_heads, num_prototypes, output_dim),
                                jnp.float32)
    wp_rows = wp_rows / jnp.maximum(
        jnp.linalg.norm(wp_rows, axis=-1, keepdims=True), 1e-12)
    wp = jnp.transpose(wp_rows, (0, 2, 1))
    return {"w1": w1, "b1": b1, "g1": g1, "be1": be1,
            "w2": w2, "b2": b2, "wp": wp}


def _reference(feats, params):
    """Plain-JAX reference for verification (per-head, two-pass BN, sqrt/div)."""
    logits_all, z_all = [], []
    for h in range(params["w1"].shape[0]):
        x = feats
        t = x @ params["w1"][h] + params["b1"][h]
        mean = jnp.mean(t, axis=0, keepdims=True)
        var = jnp.mean((t - mean) ** 2, axis=0, keepdims=True)
        t = (t - mean) / jnp.sqrt(var + 1e-5) * params["g1"][h] + params["be1"][h]
        t = jnp.maximum(t, 0.0)
        z = t @ params["w2"][h] + params["b2"][h]
        z = z / jnp.maximum(jnp.linalg.norm(z, axis=1, keepdims=True), 1e-12)
        logits_all.append(z @ params["wp"][h])
        z_all.append(z)
    return jnp.stack(logits_all), jnp.stack(z_all)


if __name__ == "__main__":
    # Small shapes consistent with the module's forward: feats (N, input_dim).
    N, input_dim, hidden_dim, output_dim = 8, 32, 32, 16
    num_prototypes, num_heads = 24, 3

    key = jax.random.PRNGKey(0)
    k_feats, k_params = jax.random.split(key)
    feats = jax.random.normal(k_feats, (N, input_dim), jnp.float32)
    params = init_params(k_params, num_heads, input_dim, hidden_dim,
                         output_dim, num_prototypes)

    logits, z = multihead_forward(feats, params)
    logits, z = jax.block_until_ready(logits), jax.block_until_ready(z)

    ref_logits, ref_z = _reference(feats, params)
    assert logits.shape == (num_heads, N, num_prototypes)
    assert z.shape == (num_heads, N, output_dim)
    # Slightly relaxed vs 1e-5 to absorb the one-pass-variance / rsqrt
    # reformulations (mathematically equivalent, tiny f32 drift).
    assert jnp.allclose(logits, ref_logits, atol=2e-5, rtol=2e-5)
    assert jnp.allclose(z, ref_z, atol=2e-5, rtol=2e-5)

    print("KERNEL_OK")
</pallas_src>

<mosaic_0001>
module attributes {stable_mosaic.version = 11 : i64} {
  func.func @kernel(%arg0: memref<8x32xf32, #tpu.memory_space<vmem>>, %arg1: memref<32x128xf32, #tpu.memory_space<vmem>>, %arg2: memref<4x128xf32, #tpu.memory_space<vmem>>, %arg3: memref<128x128xf32, #tpu.memory_space<vmem>>, %arg4: memref<128x128xf32, #tpu.memory_space<vmem>>, %arg5: memref<128x128xf32, #tpu.memory_space<vmem>>, %arg6: memref<8x128xf32, #tpu.memory_space<vmem>>, %arg7: memref<8x128xf32, #tpu.memory_space<vmem>>) attributes {dimension_semantics = [], scalar_prefetch = 0 : i64, scratch_operands = 0 : i64, tpu.core_type = #tpu.core_type<tc>} {
    %c0 = arith.constant 0 : index
    %c0_0 = arith.constant 0 : index
    %0 = vector.load %arg0[%c0, %c0_0] : memref<8x32xf32, #tpu.memory_space<vmem>>, vector<8x32xf32>
    %c0_1 = arith.constant 0 : index
    %c0_2 = arith.constant 0 : index
    %1 = vector.load %arg2[%c0_1, %c0_2] : memref<4x128xf32, #tpu.memory_space<vmem>>, vector<1x128xf32>
    %c1 = arith.constant 1 : index
    %c0_3 = arith.constant 0 : index
    %2 = vector.load %arg2[%c1, %c0_3] : memref<4x128xf32, #tpu.memory_space<vmem>>, vector<1x128xf32>
    %c2 = arith.constant 2 : index
    %c0_4 = arith.constant 0 : index
    %3 = vector.load %arg2[%c2, %c0_4] : memref<4x128xf32, #tpu.memory_space<vmem>>, vector<1x128xf32>
    %c3 = arith.constant 3 : index
    %c0_5 = arith.constant 0 : index
    %4 = vector.load %arg2[%c3, %c0_5] : memref<4x128xf32, #tpu.memory_space<vmem>>, vector<1x128xf32>
    %c0_6 = arith.constant 0 : index
    %c0_7 = arith.constant 0 : index
    %5 = vector.load %arg1[%c0_6, %c0_7] : memref<32x128xf32, #tpu.memory_space<vmem>>, vector<32x128xf32>
    %cst = arith.constant dense<0.000000e+00> : vector<8x128xf32>
    %6 = tpu.matmul %0, %5, %cst {dimension_numbers = #tpu.dot_dimension_numbers<[1], [0], [0], [1], [0, 0, 1, 1], [], []>} : vector<8x32xf32>, vector<32x128xf32>, vector<8x128xf32> -> vector<8x128xf32>
    %7 = vector.broadcast %1 : vector<1x128xf32> to vector<8x128xf32>
    %8 = arith.addf %6, %7 : vector<8x128xf32>
    %cst_8 = arith.constant dense<0.000000e+00> : vector<128xf32>
    %9 = vector.multi_reduction <add>, %8, %cst_8 [0] : vector<8x128xf32> to vector<128xf32>
    %10 = vector.shape_cast %9 : vector<128xf32> to vector<1x128xf32>
    %cst_9 = arith.constant 8.000000e+00 : f32
    %11 = vector.broadcast %cst_9 : f32 to vector<1x128xf32>
    %12 = arith.divf %10, %11 : vector<1x128xf32>
    %13 = arith.mulf %8, %8 : vector<8x128xf32>
    %cst_10 = arith.constant dense<0.000000e+00> : vector<128xf32>
    %14 = vector.multi_reduction <add>, %13, %cst_10 [0] : vector<8x128xf32> to vector<128xf32>
    %15 = vector.shape_cast %14 : vector<128xf32> to vector<1x128xf32>
    %cst_11 = arith.constant 8.000000e+00 : f32
    %16 = vector.broadcast %cst_11 : f32 to vector<1x128xf32>
    %17 = arith.divf %15, %16 : vector<1x128xf32>
    %18 = arith.mulf %12, %12 : vector<1x128xf32>
    %19 = arith.subf %17, %18 : vector<1x128xf32>
    %cst_12 = arith.constant 0.000000e+00 : f32
    %20 = vector.broadcast %cst_12 : f32 to vector<1x128xf32>
    %21 = arith.maximumf %19, %20 : vector<1x128xf32>
    %22 = vector.broadcast %12 : vector<1x128xf32> to vector<8x128xf32>
    %23 = arith.subf %8, %22 : vector<8x128xf32>
    %cst_13 = arith.constant 9.99999974E-6 : f32
    %24 = vector.broadcast %cst_13 : f32 to vector<1x128xf32>
    %25 = arith.addf %21, %24 : vector<1x128xf32>
    %26 = math.rsqrt %25 : vector<1x128xf32>
    %27 = vector.broadcast %26 : vector<1x128xf32> to vector<8x128xf32>
    %28 = arith.mulf %23, %27 : vector<8x128xf32>
    %29 = vector.broadcast %2 : vector<1x128xf32> to vector<8x128xf32>
    %30 = arith.mulf %28, %29 : vector<8x128xf32>
    %31 = vector.broadcast %3 : vector<1x128xf32> to vector<8x128xf32>
    %32 = arith.addf %30, %31 : vector<8x128xf32>
    %cst_14 = arith.constant 0.000000e+00 : f32
    %33 = vector.broadcast %cst_14 : f32 to vector<8x128xf32>
    %34 = arith.maximumf %32, %33 : vector<8x128xf32>
    %c0_15 = arith.constant 0 : index
    %c0_16 = arith.constant 0 : index
    %35 = vector.load %arg3[%c0_15, %c0_16] : memref<128x128xf32, #tpu.memory_space<vmem>>, vector<128x128xf32>
    %cst_17 = arith.constant dense<0.000000e+00> : vector<8x128xf32>
    %36 = tpu.matmul %34, %35, %cst_17 {dimension_numbers = #tpu.dot_dimension_numbers<[1], [0], [0], [1], [0, 0, 1, 1], [], []>} : vector<8x128xf32>, vector<128x128xf32>, vector<8x128xf32> -> vector<8x128xf32>
    %37 = vector.broadcast %4 : vector<1x128xf32> to vector<8x128xf32>
    %38 = arith.addf %36, %37 : vector<8x128xf32>
    %39 = arith.mulf %38, %38 : vector<8x128xf32>
    %c0_18 = arith.constant 0 : index
    %c0_19 = arith.constant 0 : index
    %40 = vector.load %arg4[%c0_18, %c0_19] : memref<128x128xf32, #tpu.memory_space<vmem>>, vector<128x128xf32>
    %cst_20 = arith.constant dense<0.000000e+00> : vector<8x128xf32>
    %41 = tpu.matmul %39, %40, %cst_20 {dimension_numbers = #tpu.dot_dimension_numbers<[1], [0], [0], [1], [0, 0, 1, 1], [], []>} : vector<8x128xf32>, vector<128x128xf32>, vector<8x128xf32> -> vector<8x128xf32>
    %cst_21 = arith.constant 1.000000e-24 : f32
    %42 = vector.broadcast %cst_21 : f32 to vector<8x128xf32>
    %43 = arith.maximumf %41, %42 : vector<8x128xf32>
    %44 = math.rsqrt %43 : vector<8x128xf32>
    %45 = arith.mulf %38, %44 : vector<8x128xf32>
    %c0_22 = arith.constant 0 : index
    %c0_23 = arith.constant 0 : index
    %46 = vector.load %arg5[%c0_22, %c0_23] : memref<128x128xf32, #tpu.memory_space<vmem>>, vector<128x128xf32>
    %cst_24 = arith.constant dense<0.000000e+00> : vector<8x128xf32>
    %47 = tpu.matmul %45, %46, %cst_24 {dimension_numbers = #tpu.dot_dimension_numbers<[1], [0], [0], [1], [0, 0, 1, 1], [], []>} : vector<8x128xf32>, vector<128x128xf32>, vector<8x128xf32> -> vector<8x128xf32>
    %c0_25 = arith.constant 0 : index
    %c0_26 = arith.constant 0 : index
    %48 = vector.load %arg6[%c0_25, %c0_26] : memref<8x128xf32, #tpu.memory_space<vmem>>, vector<8x128xf32>
    tpu.vector_store %arg6[%c0_25, %c0_26], %47 {strides = array<i32>} : memref<8x128xf32, #tpu.memory_space<vmem>>, vector<8x128xf32>,
    %c0_27 = arith.constant 0 : index
    %c0_28 = arith.constant 0 : index
    %49 = vector.load %arg7[%c0_27, %c0_28] : memref<8x128xf32, #tpu.memory_space<vmem>>, vector<8x128xf32>
    tpu.vector_store %arg7[%c0_27, %c0_28], %45 {strides = array<i32>} : memref<8x128xf32, #tpu.memory_space<vmem>>, vector<8x128xf32>,
    return
  }
}

</mosaic_0001>

<llo_original>
// kernel: multihead_forward.1
$region0: #{multihead_forward.1}
  #allocation0 [shape = 'u32[]', space=smem, size = 0x4, offset = 0x4, fixed_abs, tag = 'smem constant byte address 0x4 - core index']
  #allocation1 [shape = 'u32[144,128]{1,0:T(1,128)}', space=vmem, size = 0x12000, scoped, tag = 'internal scratch']
  %s0 = inlined_call_operand.vmem [shape: f32[8,32], index: 0, kind: input, shape index: {}]
  %s1 = inlined_call_operand.vmem [shape: f32[32,128], index: 1, kind: input, shape index: {}]
  %s2 = inlined_call_operand.vmem [shape: f32[4,128], index: 2, kind: input, shape index: {}]
  %s3 = inlined_call_operand.vmem [shape: f32[128,128], index: 3, kind: input, shape index: {}]
  %s4 = inlined_call_operand.vmem [shape: f32[128,128], index: 4, kind: input, shape index: {}]
  %s5 = inlined_call_operand.vmem [shape: f32[128,128], index: 5, kind: input, shape index: {}]
  %s6 = inlined_call_operand.vmem [shape: f32[8,128], index: 6, kind: output, shape index: {0}]
  %s7 = inlined_call_operand.vmem [shape: f32[8,128], index: 7, kind: output, shape index: {1}]
  %8 = xla_tuple %s6, %s7
  %s9 = sld [smem:[#allocation0]]
  $region42: #{multihead_forward.1} parent=0
    _
  %s11 = ssub.s32 1, %s9
  %s12 = scalar_select 0, %s11, %s9
  // Predicated region
  $region2: #{multihead_forward.1} parent=0 // pred_check
    _
  $region3: #{multihead_forward.1} parent=0 // pred_check_branch
    %14 = sbr.rel (0) target = $region5
  $region4: #{multihead_forward.1} parent=0 // pred_region
    _
  $region5: #{multihead_forward.1} parent=0 // pred_fallthru
    _
  // Predicated region
  $region6: #{multihead_forward.1} parent=0 // pred_check
    _
  $region7: #{multihead_forward.1} parent=0 // pred_check_branch
    %16 = sbr.rel (0) target = $region9
  $region8: #{multihead_forward.1} parent=0 // pred_region
    _
  $region9: #{multihead_forward.1} parent=0 // pred_fallthru
    _
  // Predicated region
  $region10: #{multihead_forward.1} parent=0 // pred_check
    _
  $region11: #{multihead_forward.1} parent=0 // pred_check_branch
    %18 = sbr.rel (0) target = $region13
  $region12: #{multihead_forward.1} parent=0 // pred_region
    _
  $region13: #{multihead_forward.1} parent=0 // pred_fallthru
    _
  // Predicated region
  $region14: #{multihead_forward.1} parent=0 // pred_check
    _
  $region15: #{multihead_forward.1} parent=0 // pred_check_branch
    %20 = sbr.rel (0) target = $region17
  $region16: #{multihead_forward.1} parent=0 // pred_region
    _
  $region17: #{multihead_forward.1} parent=0 // pred_fallthru
    _
  // Predicated region
  $region18: #{multihead_forward.1} parent=0 // pred_check
    _
  $region19: #{multihead_forward.1} parent=0 // pred_check_branch
    %22 = sbr.rel (0) target = $region21
  $region20: #{multihead_forward.1} parent=0 // pred_region
    _
  $region21: #{multihead_forward.1} parent=0 // pred_fallthru
    _
  // Predicated region
  $region22: #{multihead_forward.1} parent=0 // pred_check
    _
  $region23: #{multihead_forward.1} parent=0 // pred_check_branch
    %24 = sbr.rel (0) target = $region25
  $region24: #{multihead_forward.1} parent=0 // pred_region
    _
  $region25: #{multihead_forward.1} parent=0 // pred_fallthru
    _
  %v25 = vld [vmem:[%s0] sm:$0xff]
  %v26 = vld [vmem:[%s2] sm:$0x1]
  %v27 = vld [vmem:[%s2 + $0x1] sm:$0x1]
  %v28 = vld [vmem:[%s2 + $0x2] sm:$0x1]
  %v29 = vld [vmem:[%s2 + $0x3] sm:$0x1]
  %v30 = vld [vmem:[%s1] sm:$0xff]
  %v31 = vld [vmem:[%s1 + $0x8] sm:$0xff]
  %v32 = vld [vmem:[%s1 + $0x10] sm:$0xff]
  %v33 = vld [vmem:[%s1 + $0x18] sm:$0xff]
  %v34 = vlaneseq
  %v35 = vshrl.u32 %v34, 7
  %v36 = vsub.s32 0, %v35
  %v37 = vrot.slane %v26, %v36
  %vm38 = vcmask 261120
  %v40 = vsel %vm38, %v25, 0
  %42 = vmatprep.subr.mxu0 0.0
  %43 = vmatpush1.msra.mxu0 %v30
  %44 = vmatprep.subr.mxu0 0.0
  %45 = vmatpush1.msra.mxu0 %v31
  %46 = vmatprep.subr.mxu0 0.0
  %47 = vmatpush1.msra.mxu0 %v32
  %48 = vmatprep.subr.mxu0 0.0
  %49 = vmatpush1.msra.mxu0 %v33
  %50 = vmatprep.subr.mxu0 0.0
  %51 = vmatpush1.msra.mxu0 0.0
  %52 = vmatprep.subr.mxu0 0.0
  %53 = vmatpush1.msra.mxu0 0.0
  %54 = vmatprep.subr.mxu0 0.0
  %55 = vmatpush1.msra.mxu0 0.0
  %56 = vmatprep.subr.mxu0 0.0
  %57 = vmatpush1.msra.mxu0 0.0
  %58 = vmatprep.subr.mxu0 0.0
  %59 = vmatpush1.msra.mxu0 0.0
  %60 = vmatprep.subr.mxu0 0.0
  %61 = vmatpush1.msra.mxu0 0.0
  %62 = vmatprep.subr.mxu0 0.0
  %63 = vmatpush1.msra.mxu0 0.0
  %64 = vmatprep.subr.mxu0 0.0
  %65 = vmatpush1.msra.mxu0 0.0
  %66 = vmatprep.subr.mxu0 0.0
  %67 = vmatpush1.msra.mxu0 0.0
  %68 = vmatprep.subr.mxu0 0.0
  %69 = vmatpush1.msra.mxu0 0.0
  %70 = vmatprep.subr.mxu0 0.0
  %71 = vmatpush1.msra.mxu0 0.0
  %72 = vmatprep.subr.mxu0 0.0
  %73 = vmatpush1.msra.mxu0 0.0
  %74 = vmatprep.subr.mxu0 0.0
  %75 = vmatpush1.msra.mxu0 0.0
  %76 = vmatprep.subr.mxu0 0.0
  %77 = vmatpush1.msra.mxu0 0.0
  %78 = vmatprep.subr.mxu0 0.0
  %79 = vmatpush1.msra.mxu0 0.0
  %80 = vmatprep.subr.mxu0 0.0
  %81 = vmatpush1.msra.mxu0 0.0
  %82 = vmatprep.subr.mxu0 0.0
  %83 = vmatpush1.msra.mxu0 0.0
  %84 = vmatprep.subr.mxu0 0.0
  %85 = vmatpush1.msra.mxu0 0.0
  %86 = vmatprep.subr.mxu0 0.0
  %87 = vmatpush1.msra.mxu0 0.0
  %88 = vmatprep.subr.mxu0 0.0
  %89 = vmatpush1.msra.mxu0 0.0
  %90 = vmatprep.subr.mxu0 0.0
  %91 = vmatpush1.msra.mxu0 0.0
  %92 = vmatprep.subr.mxu0 0.0
  %93 = vmatpush1.msra.mxu0 0.0
  %94 = vmatprep.subr.mxu0 0.0
  %95 = vmatpush1.msra.mxu0 0.0
  %96 = vmatprep.subr.mxu0 0.0
  %97 = vmatpush1.msra.mxu0 0.0
  %98 = vmatprep.subr.mxu0 0.0
  %99 = vmatpush1.msra.mxu0 0.0
  %100 = vmatprep.subr.mxu0 0.0
  %101 = vmatpush1.msra.mxu0 0.0
  %102 = vmatprep.subr.mxu0 0.0
  %103 = vmatpush1.msra.mxu0 0.0
  %104 = vmatprep.subr.mxu0 0.0
  %105 = vmatpush1.msra.mxu0 0.0
  %106 = vmatprep.mubr.f32.mxu0 0.0
  %107 = vmatmul.mubr.f32.gmra.mrb[0].mxu0 %v40
  %v108 = vpop.f32.mrb[0].mxu0
  %v109 = vadd.f32 %v37, %v108
  %v110 = vpop.f32.mrb[0].mxu0
  %111 = vdwg.mxu0
  %v112 = vrot.slane %v109, 4
  %v113 = vadd.f32 %v109, %v112
  %v114 = vrot.slane %v113, 2
  %v115 = vadd.f32 %v113, %v114
  %v116 = vrot.slane %v115, 1
  %v117 = vadd.f32 %v115, %v116
  %v118 = vrcp.pop 8.0
  %v119 = vmul.f32 %v117, %v118
  %v120 = vmul.f32 %v109, %v109
  %v121 = vrot.slane %v120, 4
  %v122 = vadd.f32 %v120, %v121
  %v123 = vrot.slane %v122, 2
  %v124 = vadd.f32 %v122, %v123
  %v125 = vrot.slane %v124, 1
  %v126 = vadd.f32 %v124, %v125
  %v127 = vmul.f32 %v126, %v118
  %v128 = vmul.f32 %v119, %v119
  %v129 = vsub.f32 %v127, %v128
  %v130 = vmax.f32 %v129, 0.0
  %v131 = vsub.f32 %v109, %v119
  %v132 = vadd.f32 %v130, 1e-05
  %v133 = vrsqrt.pop %v132
  %v134 = vmul.f32 %v131, %v133
  %v135 = vlaneseq
  %v136 = vshrl.u32 %v135, 7
  %v137 = vsub.s32 0, %v136
  %v138 = vrot.slane %v27, %v137
  %v139 = vmul.f32 %v134, %v138
  %v140 = vlaneseq
  %v141 = vshrl.u32 %v140, 7
  %v142 = vsub.s32 0, %v141
  %v143 = vrot.slane %v28, %v142
  %v144 = vadd.f32 %v139, %v143
  %v145 = vmax.f32 %v144, 0.0
  %v146 = vld [vmem:[%s3] sm:$0xff]
  %v147 = vld [vmem:[%s3 + $0x8] sm:$0xff]
  %v148 = vld [vmem:[%s3 + $0x10] sm:$0xff]
  %v149 = vld [vmem:[%s3 + $0x18] sm:$0xff]
  %v150 = vld [vmem:[%s3 + $0x20] sm:$0xff]
  %v151 = vld [vmem:[%s3 + $0x28] sm:$0xff]
  %v152 = vld [vmem:[%s3 + $0x30] sm:$0xff]
  %v153 = vld [vmem:[%s3 + $0x38] sm:$0xff]
  %v154 = vld [vmem:[%s3 + $0x40] sm:$0xff]
  %v155 = vld [vmem:[%s3 + $0x48] sm:$0xff]
  %v156 = vld [vmem:[%s3 + $0x50] sm:$0xff]
  %v157 = vld [vmem:[%s3 + $0x58] sm:$0xff]
  %v158 = vld [vmem:[%s3 + $0x60] sm:$0xff]
  %v159 = vld [vmem:[%s3 + $0x68] sm:$0xff]
  %v160 = vld [vmem:[%s3 + $0x70] sm:$0xff]
  %v161 = vld [vmem:[%s3 + $0x78] sm:$0xff]
  %v162 = vlaneseq
  %v163 = vshrl.u32 %v162, 7
  %v164 = vsub.s32 0, %v163
  %v165 = vrot.slane %v29, %v164
  %166 = vmatprep.subr.mxu0 0.0
  %167 = vmatpush1.msra.mxu0 %v146
  %168 = vmatprep.subr.mxu0 0.0
  %169 = vmatpush1.msra.mxu0 %v147
  %170 = vmatprep.subr.mxu0 0.0
  %171 = vmatpush1.msra.mxu0 %v148
  %172 = vmatprep.subr.mxu0 0.0
  %173 = vmatpush1.msra.mxu0 %v149
  %174 = vmatprep.subr.mxu0 0.0
  %175 = vmatpush1.msra.mxu0 %v150
  %176 = vmatprep.subr.mxu0 0.0
  %177 = vmatpush1.msra.mxu0 %v151
  %178 = vmatprep.subr.mxu0 0.0
  %179 = vmatpush1.msra.mxu0 %v152
  %180 = vmatprep.subr.mxu0 0.0
  %181 = vmatpush1.msra.mxu0 %v153
  %182 = vmatprep.subr.mxu0 0.0
  %183 = vmatpush1.msra.mxu0 %v154
  %184 = vmatprep.subr.mxu0 0.0
  %185 = vmatpush1.msra.mxu0 %v155
  %186 = vmatprep.subr.mxu0 0.0
  %187 = vmatpush1.msra.mxu0 %v156
  %188 = vmatprep.subr.mxu0 0.0
  %189 = vmatpush1.msra.mxu0 %v157
  %190 = vmatprep.subr.mxu0 0.0
  %191 = vmatpush1.msra.mxu0 %v158
  %192 = vmatprep.subr.mxu0 0.0
  %193 = vmatpush1.msra.mxu0 %v159
  %194 = vmatprep.subr.mxu0 0.0
  %195 = vmatpush1.msra.mxu0 %v160
  %196 = vmatprep.subr.mxu0 0.0
  %197 = vmatpush1.msra.mxu0 %v161
  %198 = vmatprep.subr.mxu0 0.0
  %199 = vmatpush1.msra.mxu0 0.0
  %200 = vmatprep.subr.mxu0 0.0
  %201 = vmatpush1.msra.mxu0 0.0
  %202 = vmatprep.subr.mxu0 0.0
  %203 = vmatpush1.msra.mxu0 0.0
  %204 = vmatprep.subr.mxu0 0.0
  %205 = vmatpush1.msra.mxu0 0.0
  %206 = vmatprep.subr.mxu0 0.0
  %207 = vmatpush1.msra.mxu0 0.0
  %208 = vmatprep.subr.mxu0 0.0
  %209 = vmatpush1.msra.mxu0 0.0
  %210 = vmatprep.subr.mxu0 0.0
  %211 = vmatpush1.msra.mxu0 0.0
  %212 = vmatprep.subr.mxu0 0.0
  %213 = vmatpush1.msra.mxu0 0.0
  %214 = vmatprep.subr.mxu0 0.0
  %215 = vmatpush1.msra.mxu0 0.0
  %216 = vmatprep.subr.mxu0 0.0
  %217 = vmatpush1.msra.mxu0 0.0
  %218 = vmatprep.subr.mxu0 0.0
  %219 = vmatpush1.msra.mxu0 0.0
  %220 = vmatprep.subr.mxu0 0.0
  %221 = vmatpush1.msra.mxu0 0.0
  %222 = vmatprep.subr.mxu0 0.0
  %223 = vmatpush1.msra.mxu0 0.0
  %224 = vmatprep.subr.mxu0 0.0
  %225 = vmatpush1.msra.mxu0 0.0
  %226 = vmatprep.subr.mxu0 0.0
  %227 = vmatpush1.msra.mxu0 0.0
  %228 = vmatprep.subr.mxu0 0.0
  %229 = vmatpush1.msra.mxu0 0.0
  %230 = vmatprep.mubr.f32.mxu0 0.0
  %231 = vmatmul.mubr.f32.gmra.mrb[0].mxu0 %v145
  %v232 = vpop.f32.mrb[0].mxu0
  %v233 = vadd.f32 %v165, %v232
  %v234 = vpop.f32.mrb[0].mxu0
  %235 = vdwg.mxu0
  %v236 = vmul.f32 %v233, %v233
  %v237 = vld [vmem:[%s4] sm:$0xff]
  %v238 = vld [vmem:[%s4 + $0x8] sm:$0xff]
  %v239 = vld [vmem:[%s4 + $0x10] sm:$0xff]
  %v240 = vld [vmem:[%s4 + $0x18] sm:$0xff]
  %v241 = vld [vmem:[%s4 + $0x20] sm:$0xff]
  %v242 = vld [vmem:[%s4 + $0x28] sm:$0xff]
  %v243 = vld [vmem:[%s4 + $0x30] sm:$0xff]
  %v244 = vld [vmem:[%s4 + $0x38] sm:$0xff]
  %v245 = vld [vmem:[%s4 + $0x40] sm:$0xff]
  %v246 = vld [vmem:[%s4 + $0x48] sm:$0xff]
  %v247 = vld [vmem:[%s4 + $0x50] sm:$0xff]
  %v248 = vld [vmem:[%s4 + $0x58] sm:$0xff]
  %v249 = vld [vmem:[%s4 + $0x60] sm:$0xff]
  %v250 = vld [vmem:[%s4 + $0x68] sm:$0xff]
  %v251 = vld [vmem:[%s4 + $0x70] sm:$0xff]
  %v252 = vld [vmem:[%s4 + $0x78] sm:$0xff]
  %253 = vmatprep.subr.mxu0 0.0
  %254 = vmatpush1.msra.mxu0 %v237
  %255 = vmatprep.subr.mxu0 0.0
  %256 = vmatpush1.msra.mxu0 %v238
  %257 = vmatprep.subr.mxu0 0.0
  %258 = vmatpush1.msra.mxu0 %v239
  %259 = vmatprep.subr.mxu0 0.0
  %260 = vmatpush1.msra.mxu0 %v240
  %261 = vmatprep.subr.mxu0 0.0
  %262 = vmatpush1.msra.mxu0 %v241
  %263 = vmatprep.subr.mxu0 0.0
  %264 = vmatpush1.msra.mxu0 %v242
  %265 = vmatprep.subr.mxu0 0.0
  %266 = vmatpush1.msra.mxu0 %v243
  %267 = vmatprep.subr.mxu0 0.0
  %268 = vmatpush1.msra.mxu0 %v244
  %269 = vmatprep.subr.mxu0 0.0
  %270 = vmatpush1.msra.mxu0 %v245
  %271 = vmatprep.subr.mxu0 0.0
  %272 = vmatpush1.msra.mxu0 %v246
  %273 = vmatprep.subr.mxu0 0.0
  %274 = vmatpush1.msra.mxu0 %v247
  %275 = vmatprep.subr.mxu0 0.0
  %276 = vmatpush1.msra.mxu0 %v248
  %277 = vmatprep.subr.mxu0 0.0
  %278 = vmatpush1.msra.mxu0 %v249
  %279 = vmatprep.subr.mxu0 0.0
  %280 = vmatpush1.msra.mxu0 %v250
  %281 = vmatprep.subr.mxu0 0.0
  %282 = vmatpush1.msra.mxu0 %v251
  %283 = vmatprep.subr.mxu0 0.0
  %284 = vmatpush1.msra.mxu0 %v252
  %285 = vmatprep.subr.mxu0 0.0
  %286 = vmatpush1.msra.mxu0 0.0
  %287 = vmatprep.subr.mxu0 0.0
  %288 = vmatpush1.msra.mxu0 0.0
  %289 = vmatprep.subr.mxu0 0.0
  %290 = vmatpush1.msra.mxu0 0.0
  %291 = vmatprep.subr.mxu0 0.0
  %292 = vmatpush1.msra.mxu0 0.0
  %293 = vmatprep.subr.mxu0 0.0
  %294 = vmatpush1.msra.mxu0 0.0
  %295 = vmatprep.subr.mxu0 0.0
  %296 = vmatpush1.msra.mxu0 0.0
  %297 = vmatprep.subr.mxu0 0.0
  %298 = vmatpush1.msra.mxu0 0.0
  %299 = vmatprep.subr.mxu0 0.0
  %300 = vmatpush1.msra.mxu0 0.0
  %301 = vmatprep.subr.mxu0 0.0
  %302 = vmatpush1.msra.mxu0 0.0
  %303 = vmatprep.subr.mxu0 0.0
  %304 = vmatpush1.msra.mxu0 0.0
  %305 = vmatprep.subr.mxu0 0.0
  %306 = vmatpush1.msra.mxu0 0.0
  %307 = vmatprep.subr.mxu0 0.0
  %308 = vmatpush1.msra.mxu0 0.0
  %309 = vmatprep.subr.mxu0 0.0
  %310 = vmatpush1.msra.mxu0 0.0
  %311 = vmatprep.subr.mxu0 0.0
  %312 = vmatpush1.msra.mxu0 0.0
  %313 = vmatprep.subr.mxu0 0.0
  %314 = vmatpush1.msra.mxu0 0.0
  %315 = vmatprep.subr.mxu0 0.0
  %316 = vmatpush1.msra.mxu0 0.0
  %317 = vmatprep.mubr.f32.mxu0 0.0
  %318 = vmatmul.mubr.f32.gmra.mrb[0].mxu0 %v236
  %v319 = vpop.f32.mrb[0].mxu0
  %v320 = vadd.f32 0.0, %v319
  %v321 = vpop.f32.mrb[0].mxu0
  %322 = vdwg.mxu0
  %v323 = vmax.f32 %v320, 1e-24
  %v324 = vrsqrt.pop %v323
  %v325 = vmul.f32 %v233, %v324
  %v326 = vld [vmem:[%s5] sm:$0xff]
  %v327 = vld [vmem:[%s5 + $0x8] sm:$0xff]
  %v328 = vld [vmem:[%s5 + $0x10] sm:$0xff]
  %v329 = vld [vmem:[%s5 + $0x18] sm:$0xff]
  %v330 = vld [vmem:[%s5 + $0x20] sm:$0xff]
  %v331 = vld [vmem:[%s5 + $0x28] sm:$0xff]
  %v332 = vld [vmem:[%s5 + $0x30] sm:$0xff]
  %v333 = vld [vmem:[%s5 + $0x38] sm:$0xff]
  %v334 = vld [vmem:[%s5 + $0x40] sm:$0xff]
  %v335 = vld [vmem:[%s5 + $0x48] sm:$0xff]
  %v336 = vld [vmem:[%s5 + $0x50] sm:$0xff]
  %v337 = vld [vmem:[%s5 + $0x58] sm:$0xff]
  %v338 = vld [vmem:[%s5 + $0x60] sm:$0xff]
  %v339 = vld [vmem:[%s5 + $0x68] sm:$0xff]
  %v340 = vld [vmem:[%s5 + $0x70] sm:$0xff]
  %v341 = vld [vmem:[%s5 + $0x78] sm:$0xff]
  %342 = vmatprep.subr.mxu0 0.0
  %343 = vmatpush1.msra.mxu0 %v326
  %344 = vmatprep.subr.mxu0 0.0
  %345 = vmatpush1.msra.mxu0 %v327
  %346 = vmatprep.subr.mxu0 0.0
  %347 = vmatpush1.msra.mxu0 %v328
  %348 = vmatprep.subr.mxu0 0.0
  %349 = vmatpush1.msra.mxu0 %v329
  %350 = vmatprep.subr.mxu0 0.0
  %351 = vmatpush1.msra.mxu0 %v330
  %352 = vmatprep.subr.mxu0 0.0
  %353 = vmatpush1.msra.mxu0 %v331
  %354 = vmatprep.subr.mxu0 0.0
  %355 = vmatpush1.msra.mxu0 %v332
  %356 = vmatprep.subr.mxu0 0.0
  %357 = vmatpush1.msra.mxu0 %v333
  %358 = vmatprep.subr.mxu0 0.0
  %359 = vmatpush1.msra.mxu0 %v334
  %360 = vmatprep.subr.mxu0 0.0
  %361 = vmatpush1.msra.mxu0 %v335
  %362 = vmatprep.subr.mxu0 0.0
  %363 = vmatpush1.msra.mxu0 %v336
  %364 = vmatprep.subr.mxu0 0.0
  %365 = vmatpush1.msra.mxu0 %v337
  %366 = vmatprep.subr.mxu0 0.0
  %367 = vmatpush1.msra.mxu0 %v338
  %368 = vmatprep.subr.mxu0 0.0
  %369 = vmatpush1.msra.mxu0 %v339
  %370 = vmatprep.subr.mxu0 0.0
  %371 = vmatpush1.msra.mxu0 %v340
  %372 = vmatprep.subr.mxu0 0.0
  %373 = vmatpush1.msra.mxu0 %v341
  %374 = vmatprep.subr.mxu0 0.0
  %375 = vmatpush1.msra.mxu0 0.0
  %376 = vmatprep.subr.mxu0 0.0
  %377 = vmatpush1.msra.mxu0 0.0
  %378 = vmatprep.subr.mxu0 0.0
  %379 = vmatpush1.msra.mxu0 0.0
  %380 = vmatprep.subr.mxu0 0.0
  %381 = vmatpush1.msra.mxu0 0.0
  %382 = vmatprep.subr.mxu0 0.0
  %383 = vmatpush1.msra.mxu0 0.0
  %384 = vmatprep.subr.mxu0 0.0
  %385 = vmatpush1.msra.mxu0 0.0
  %386 = vmatprep.subr.mxu0 0.0
  %387 = vmatpush1.msra.mxu0 0.0
  %388 = vmatprep.subr.mxu0 0.0
  %389 = vmatpush1.msra.mxu0 0.0
  %390 = vmatprep.subr.mxu0 0.0
  %391 = vmatpush1.msra.mxu0 0.0
  %392 = vmatprep.subr.mxu0 0.0
  %393 = vmatpush1.msra.mxu0 0.0
  %394 = vmatprep.subr.mxu0 0.0
  %395 = vmatpush1.msra.mxu0 0.0
  %396 = vmatprep.subr.mxu0 0.0
  %397 = vmatpush1.msra.mxu0 0.0
  %398 = vmatprep.subr.mxu0 0.0
  %399 = vmatpush1.msra.mxu0 0.0
  %400 = vmatprep.subr.mxu0 0.0
  %401 = vmatpush1.msra.mxu0 0.0
  %402 = vmatprep.subr.mxu0 0.0
  %403 = vmatpush1.msra.mxu0 0.0
  %404 = vmatprep.subr.mxu0 0.0
  %405 = vmatpush1.msra.mxu0 0.0
  %406 = vmatprep.mubr.f32.mxu0 0.0
  %407 = vmatmul.mubr.f32.gmra.mrb[0].mxu0 %v325
  %v408 = vpop.f32.mrb[0].mxu0
  %v409 = vadd.f32 0.0, %v408
  %v410 = vpop.f32.mrb[0].mxu0
  %411 = vdwg.mxu0
  %412 = vst [vmem:[%s6] sm:$0xff] %v409
  %413 = vst [vmem:[%s7] sm:$0xff] %v325
  // Predicated region
  $region26: #{multihead_forward.1} parent=0 // pred_check
    _
  $region27: #{multihead_forward.1} parent=0 // pred_check_branch
    %415 = sbr.rel (0) target = $region29
  $region28: #{multihead_forward.1} parent=0 // pred_region
    _
  $region29: #{multihead_forward.1} parent=0 // pred_fallthru
    _
  // Predicated region
  $region30: #{multihead_forward.1} parent=0 // pred_check
    _
  $region31: #{multihead_forward.1} parent=0 // pred_check_branch
    %417 = sbr.rel (0) target = $region33
  $region32: #{multihead_forward.1} parent=0 // pred_region
    _
  $region33: #{multihead_forward.1} parent=0 // pred_fallthru
    _
  // Predicated region
  $region34: #{multihead_forward.1} parent=0 // pred_check
    _
  $region35: #{multihead_forward.1} parent=0 // pred_check_branch
    %419 = sbr.rel (0) target = $region37
  $region36: #{multihead_forward.1} parent=0 // pred_region
    _
  $region37: #{multihead_forward.1} parent=0 // pred_fallthru
    _
  // Predicated region
  $region38: #{multihead_forward.1} parent=0 // pred_check
    _
  $region39: #{multihead_forward.1} parent=0 // pred_check_branch
    %421 = sbr.rel (0) target = $region41
  $region40: #{multihead_forward.1} parent=0 // pred_region
    _
  $region41: #{multihead_forward.1} parent=0 // pred_fallthru
    _

</llo_original>
